<compile_context>
chip_gen: v7x
topology: tpu7x:2x2x1
jax: 0.10.0
libtpu: 0.0.40
codegen_flags: <defaults>
</compile_context>

<pallas_src>
import functools

import jax
import jax.numpy as jnp
from jax.experimental import pallas as pl
from jax.experimental.pallas import tpu as pltpu

LANE = 128     # lane width: last-dim alignment target
SUBLANE = 8    # sublane alignment for the second-to-last dim


def _round_up(n, m):
    return (n + m - 1) // m * m


def dropout_mlp_kernel(*refs, training):
    """Fused 4-layer MLP forward for one (TB, features) batch tile.

    Dropout is applied by multiplying with pre-scaled keep masks
    (values 0 or 1/(1-p)); masks are generated outside the kernel, so the
    kernel body is pure MXU matmuls plus a small VPU epilogue and contains no
    TPU-only PRNG primitives.
    """
    if training:
        (x_ref, m_in_ref, m_h1_ref, m_h2_ref,
         w1_ref, b1_ref, w2_ref, b2_ref,
         w3_ref, b3_ref, w4_ref, b4_ref, out_ref) = refs
    else:
        (x_ref,
         w1_ref, b1_ref, w2_ref, b2_ref,
         w3_ref, b3_ref, w4_ref, b4_ref, out_ref) = refs

    out = x_ref[...].astype(jnp.float32)

    # input dropout (p = 0.2)
    if training:
        out = out * m_in_ref[...]

    # l1 + relu + hidden dropout (p = 0.5)
    out = jnp.dot(out, w1_ref[...], preferred_element_type=jnp.float32) + b1_ref[...]
    out = jnp.maximum(out, 0.0)
    if training:
        out = out * m_h1_ref[...]

    # l2 + relu + hidden dropout (p = 0.5)
    out = jnp.dot(out, w2_ref[...], preferred_element_type=jnp.float32) + b2_ref[...]
    out = jnp.maximum(out, 0.0)
    if training:
        out = out * m_h2_ref[...]

    # l3 + relu
    out = jnp.dot(out, w3_ref[...], preferred_element_type=jnp.float32) + b3_ref[...]
    out = jnp.maximum(out, 0.0)

    # l4 (logits, no activation)
    out = jnp.dot(out, w4_ref[...], preferred_element_type=jnp.float32) + b4_ref[...]

    out_ref[...] = out.astype(out_ref.dtype)


def dropout_neural_net(x, params, key, *, training=True, block_batch=128,
                       p_in=0.2, p_hid=0.5):
    """Forward pass of DropoutNeuralNet.

    x:      (B, input_size) float32
    params: dict with w1..w4 pre-transposed to (in, out) and b1..b4 of (1, out)
    key:    jax PRNG key for the dropout masks (used only when training=True)
    """
    B, in_features = x.shape
    hidden = params["w1"].shape[1]
    num_classes = params["w4"].shape[1]

    # lane-aligned padded feature dims
    IN_P = _round_up(in_features, LANE)
    H_P = _round_up(hidden, LANE)
    C_P = _round_up(num_classes, LANE)

    # batch tiling: TB is a multiple of the sublane (8), capped at block_batch
    TB = min(block_batch, _round_up(B, SUBLANE))
    B_P = _round_up(B, TB)
    grid = (B_P // TB,)

    # zero-pad activations and params (host/XLA side, outside the kernel)
    x_p = jnp.pad(x.astype(jnp.float32),
                  ((0, B_P - B), (0, IN_P - in_features)))
    dims = [(in_features, hidden), (hidden, hidden),
            (hidden, hidden), (hidden, num_classes)]
    wpad, bpad = {}, {}
    for idx, (kin, kout) in enumerate(dims, start=1):
        kp, np_ = _round_up(kin, LANE), _round_up(kout, LANE)
        wpad[idx] = jnp.pad(params[f"w{idx}"], ((0, kp - kin), (0, np_ - kout)))
        bpad[idx] = jnp.pad(params[f"b{idx}"], ((0, 0), (0, np_ - kout)))

    def batch_tile(feat):
        return pl.BlockSpec((TB, feat), lambda i: (i, 0))

    def resident(shape):
        return pl.BlockSpec(shape, lambda i: (0, 0))

    in_specs = [batch_tile(IN_P)]
    inputs = [x_p]

    if training:
        k_in, k_h1, k_h2 = jax.random.split(key, 3)
        keep_in, keep_hid = 1.0 - p_in, 1.0 - p_hid
        m_in = (jax.random.bernoulli(k_in, keep_in, (B_P, IN_P))
                .astype(jnp.float32) * (1.0 / keep_in))
        m_h1 = (jax.random.bernoulli(k_h1, keep_hid, (B_P, H_P))
                .astype(jnp.float32) * (1.0 / keep_hid))
        m_h2 = (jax.random.bernoulli(k_h2, keep_hid, (B_P, H_P))
                .astype(jnp.float32) * (1.0 / keep_hid))
        in_specs += [batch_tile(IN_P), batch_tile(H_P), batch_tile(H_P)]
        inputs += [m_in, m_h1, m_h2]

    for idx in range(1, 5):
        in_specs += [resident(wpad[idx].shape), resident(bpad[idx].shape)]
        inputs += [wpad[idx], bpad[idx]]

    out_padded = pl.pallas_call(
        functools.partial(dropout_mlp_kernel, training=training),
        out_shape=jax.ShapeDtypeStruct((B_P, C_P), jnp.float32),
        grid=grid,
        in_specs=in_specs,
        out_specs=batch_tile(C_P),
        compiler_params=pltpu.CompilerParams(
            dimension_semantics=("parallel",)),
    )(*inputs)

    # slice off batch / class padding
    return out_padded[:B, :num_classes]


def init_params(key, input_size, hidden_size, num_classes):
    """PyTorch-style Linear init: U(-1/sqrt(fan_in), 1/sqrt(fan_in))."""
    dims = [(input_size, hidden_size),
            (hidden_size, hidden_size),
            (hidden_size, hidden_size),
            (hidden_size, num_classes)]
    params = {}
    for idx, (fan_in, fan_out) in enumerate(dims, start=1):
        key, kw, kb = jax.random.split(key, 3)
        bound = 1.0 / (fan_in ** 0.5)
        # stored pre-transposed: (in_features, out_features)
        params[f"w{idx}"] = jax.random.uniform(
            kw, (fan_in, fan_out), jnp.float32, -bound, bound)
        params[f"b{idx}"] = jax.random.uniform(
            kb, (1, fan_out), jnp.float32, -bound, bound)
    return params


if __name__ == "__main__":
    input_size = 16
    hidden_size = 32
    num_classes = 8
    batch = 8

    key = jax.random.PRNGKey(0)
    key, kx, kp, kd = jax.random.split(key, 4)

    x = jax.random.normal(kx, (batch, input_size), dtype=jnp.float32)
    params = init_params(kp, input_size, hidden_size, num_classes)

    # training mode (dropout active)
    out_train = jax.block_until_ready(
        dropout_neural_net(x, params, kd, training=True))
    assert out_train.shape == (batch, num_classes)
    assert out_train.dtype == jnp.float32
    assert bool(jnp.all(jnp.isfinite(out_train)))

    # eval mode (no dropout) must match a plain-JAX reference
    out_eval = jax.block_until_ready(
        dropout_neural_net(x, params, kd, training=False))
    ref = jnp.maximum(x @ params["w1"] + params["b1"], 0.0)
    ref = jnp.maximum(ref @ params["w2"] + params["b2"], 0.0)
    ref = jnp.maximum(ref @ params["w3"] + params["b3"], 0.0)
    ref = ref @ params["w4"] + params["b4"]
    assert jnp.allclose(out_eval, ref, atol=1e-4, rtol=1e-4)

    print("KERNEL_OK")
</pallas_src>

<mosaic_0001>
module attributes {stable_mosaic.version = 11 : i64} {
  func.func @dropout_mlp_kernel(%arg0: i32, %arg1: memref<8x128xf32, #tpu.memory_space<vmem>>, %arg2: memref<8x128xf32, #tpu.memory_space<vmem>>, %arg3: memref<8x128xf32, #tpu.memory_space<vmem>>, %arg4: memref<8x128xf32, #tpu.memory_space<vmem>>, %arg5: memref<128x128xf32, #tpu.memory_space<vmem>>, %arg6: memref<1x128xf32, #tpu.memory_space<vmem>>, %arg7: memref<128x128xf32, #tpu.memory_space<vmem>>, %arg8: memref<1x128xf32, #tpu.memory_space<vmem>>, %arg9: memref<128x128xf32, #tpu.memory_space<vmem>>, %arg10: memref<1x128xf32, #tpu.memory_space<vmem>>, %arg11: memref<128x128xf32, #tpu.memory_space<vmem>>, %arg12: memref<1x128xf32, #tpu.memory_space<vmem>>, %arg13: memref<8x128xf32, #tpu.memory_space<vmem>>) attributes {dimension_semantics = [#tpu.dimension_semantics<parallel>], iteration_bounds = array<i64: 1>, scalar_prefetch = 0 : i64, scratch_operands = 0 : i64, tpu.core_type = #tpu.core_type<tc>, window_params = [{transform_indices = @transform_0, window_bounds = array<i64: 8, 128>}, {transform_indices = @transform_1, window_bounds = array<i64: 8, 128>}, {transform_indices = @transform_2, window_bounds = array<i64: 8, 128>}, {transform_indices = @transform_3, window_bounds = array<i64: 8, 128>}, {pipeline_mode = #tpu.pipeline_mode<synchronous>, transform_indices = @transform_4, window_bounds = array<i64: 128, 128>}, {pipeline_mode = #tpu.pipeline_mode<synchronous>, transform_indices = @transform_5, window_bounds = array<i64: 1, 128>}, {pipeline_mode = #tpu.pipeline_mode<synchronous>, transform_indices = @transform_6, window_bounds = array<i64: 128, 128>}, {pipeline_mode = #tpu.pipeline_mode<synchronous>, transform_indices = @transform_7, window_bounds = array<i64: 1, 128>}, {pipeline_mode = #tpu.pipeline_mode<synchronous>, transform_indices = @transform_8, window_bounds = array<i64: 128, 128>}, {pipeline_mode = #tpu.pipeline_mode<synchronous>, transform_indices = @transform_9, window_bounds = array<i64: 1, 128>}, {pipeline_mode = #tpu.pipeline_mode<synchronous>, transform_indices = @transform_10, window_bounds = array<i64: 128, 128>}, {pipeline_mode = #tpu.pipeline_mode<synchronous>, transform_indices = @transform_11, window_bounds = array<i64: 1, 128>}, {transform_indices = @transform_12, window_bounds = array<i64: 8, 128>}]} {
    %c0 = arith.constant 0 : index
    %c0_0 = arith.constant 0 : index
    %0 = vector.load %arg1[%c0, %c0_0] : memref<8x128xf32, #tpu.memory_space<vmem>>, vector<8x128xf32>
    %c0_1 = arith.constant 0 : index
    %c0_2 = arith.constant 0 : index
    %1 = vector.load %arg2[%c0_1, %c0_2] : memref<8x128xf32, #tpu.memory_space<vmem>>, vector<8x128xf32>
    %2 = arith.mulf %0, %1 : vector<8x128xf32>
    %c0_3 = arith.constant 0 : index
    %c0_4 = arith.constant 0 : index
    %3 = vector.load %arg5[%c0_3, %c0_4] : memref<128x128xf32, #tpu.memory_space<vmem>>, vector<128x128xf32>
    %cst = arith.constant dense<0.000000e+00> : vector<8x128xf32>
    %4 = tpu.matmul %2, %3, %cst {dimension_numbers = #tpu.dot_dimension_numbers<[1], [0], [0], [1], [0, 0, 1, 1], [], []>} : vector<8x128xf32>, vector<128x128xf32>, vector<8x128xf32> -> vector<8x128xf32>
    %c0_5 = arith.constant 0 : index
    %c0_6 = arith.constant 0 : index
    %5 = vector.load %arg6[%c0_5, %c0_6] : memref<1x128xf32, #tpu.memory_space<vmem>>, vector<1x128xf32>
    %6 = vector.broadcast %5 : vector<1x128xf32> to vector<8x128xf32>
    %7 = arith.addf %4, %6 : vector<8x128xf32>
    %cst_7 = arith.constant 0.000000e+00 : f32
    %8 = vector.broadcast %cst_7 : f32 to vector<8x128xf32>
    %9 = arith.maximumf %7, %8 : vector<8x128xf32>
    %c0_8 = arith.constant 0 : index
    %c0_9 = arith.constant 0 : index
    %10 = vector.load %arg3[%c0_8, %c0_9] : memref<8x128xf32, #tpu.memory_space<vmem>>, vector<8x128xf32>
    %11 = arith.mulf %9, %10 : vector<8x128xf32>
    %c0_10 = arith.constant 0 : index
    %c0_11 = arith.constant 0 : index
    %12 = vector.load %arg7[%c0_10, %c0_11] : memref<128x128xf32, #tpu.memory_space<vmem>>, vector<128x128xf32>
    %cst_12 = arith.constant dense<0.000000e+00> : vector<8x128xf32>
    %13 = tpu.matmul %11, %12, %cst_12 {dimension_numbers = #tpu.dot_dimension_numbers<[1], [0], [0], [1], [0, 0, 1, 1], [], []>} : vector<8x128xf32>, vector<128x128xf32>, vector<8x128xf32> -> vector<8x128xf32>
    %c0_13 = arith.constant 0 : index
    %c0_14 = arith.constant 0 : index
    %14 = vector.load %arg8[%c0_13, %c0_14] : memref<1x128xf32, #tpu.memory_space<vmem>>, vector<1x128xf32>
    %15 = vector.broadcast %14 : vector<1x128xf32> to vector<8x128xf32>
    %16 = arith.addf %13, %15 : vector<8x128xf32>
    %cst_15 = arith.constant 0.000000e+00 : f32
    %17 = vector.broadcast %cst_15 : f32 to vector<8x128xf32>
    %18 = arith.maximumf %16, %17 : vector<8x128xf32>
    %c0_16 = arith.constant 0 : index
    %c0_17 = arith.constant 0 : index
    %19 = vector.load %arg4[%c0_16, %c0_17] : memref<8x128xf32, #tpu.memory_space<vmem>>, vector<8x128xf32>
    %20 = arith.mulf %18, %19 : vector<8x128xf32>
    %c0_18 = arith.constant 0 : index
    %c0_19 = arith.constant 0 : index
    %21 = vector.load %arg9[%c0_18, %c0_19] : memref<128x128xf32, #tpu.memory_space<vmem>>, vector<128x128xf32>
    %cst_20 = arith.constant dense<0.000000e+00> : vector<8x128xf32>
    %22 = tpu.matmul %20, %21, %cst_20 {dimension_numbers = #tpu.dot_dimension_numbers<[1], [0], [0], [1], [0, 0, 1, 1], [], []>} : vector<8x128xf32>, vector<128x128xf32>, vector<8x128xf32> -> vector<8x128xf32>
    %c0_21 = arith.constant 0 : index
    %c0_22 = arith.constant 0 : index
    %23 = vector.load %arg10[%c0_21, %c0_22] : memref<1x128xf32, #tpu.memory_space<vmem>>, vector<1x128xf32>
    %24 = vector.broadcast %23 : vector<1x128xf32> to vector<8x128xf32>
    %25 = arith.addf %22, %24 : vector<8x128xf32>
    %cst_23 = arith.constant 0.000000e+00 : f32
    %26 = vector.broadcast %cst_23 : f32 to vector<8x128xf32>
    %27 = arith.maximumf %25, %26 : vector<8x128xf32>
    %c0_24 = arith.constant 0 : index
    %c0_25 = arith.constant 0 : index
    %28 = vector.load %arg11[%c0_24, %c0_25] : memref<128x128xf32, #tpu.memory_space<vmem>>, vector<128x128xf32>
    %cst_26 = arith.constant dense<0.000000e+00> : vector<8x128xf32>
    %29 = tpu.matmul %27, %28, %cst_26 {dimension_numbers = #tpu.dot_dimension_numbers<[1], [0], [0], [1], [0, 0, 1, 1], [], []>} : vector<8x128xf32>, vector<128x128xf32>, vector<8x128xf32> -> vector<8x128xf32>
    %c0_27 = arith.constant 0 : index
    %c0_28 = arith.constant 0 : index
    %30 = vector.load %arg12[%c0_27, %c0_28] : memref<1x128xf32, #tpu.memory_space<vmem>>, vector<1x128xf32>
    %31 = vector.broadcast %30 : vector<1x128xf32> to vector<8x128xf32>
    %32 = arith.addf %29, %31 : vector<8x128xf32>
    %c0_29 = arith.constant 0 : index
    %c0_30 = arith.constant 0 : index
    %33 = vector.load %arg13[%c0_29, %c0_30] : memref<8x128xf32, #tpu.memory_space<vmem>>, vector<8x128xf32>
    tpu.vector_store %arg13[%c0_29, %c0_30], %32 {strides = array<i32>} : memref<8x128xf32, #tpu.memory_space<vmem>>, vector<8x128xf32>,
    return
  }
  func.func @transform_0(%arg0: i32) -> (i32, i32) {
    %c0_i32 = arith.constant 0 : i32
    %c0_i32_0 = arith.constant 0 : i32
    return %arg0, %c0_i32 : i32, i32
  }
  func.func @transform_1(%arg0: i32) -> (i32, i32) {
    %c0_i32 = arith.constant 0 : i32
    %c0_i32_0 = arith.constant 0 : i32
    return %arg0, %c0_i32 : i32, i32
  }
  func.func @transform_2(%arg0: i32) -> (i32, i32) {
    %c0_i32 = arith.constant 0 : i32
    %c0_i32_0 = arith.constant 0 : i32
    return %arg0, %c0_i32 : i32, i32
  }
  func.func @transform_3(%arg0: i32) -> (i32, i32) {
    %c0_i32 = arith.constant 0 : i32
    %c0_i32_0 = arith.constant 0 : i32
    return %arg0, %c0_i32 : i32, i32
  }
  func.func @transform_4(%arg0: i32) -> (i32, i32) {
    %c0_i32 = arith.constant 0 : i32
    %c0_i32_0 = arith.constant 0 : i32
    %c0_i32_1 = arith.constant 0 : i32
    return %c0_i32, %c0_i32_0 : i32, i32
  }
  func.func @transform_5(%arg0: i32) -> (i32, i32) {
    %c0_i32 = arith.constant 0 : i32
    %c0_i32_0 = arith.constant 0 : i32
    %c0_i32_1 = arith.constant 0 : i32
    return %c0_i32, %c0_i32_0 : i32, i32
  }
  func.func @transform_6(%arg0: i32) -> (i32, i32) {
    %c0_i32 = arith.constant 0 : i32
    %c0_i32_0 = arith.constant 0 : i32
    %c0_i32_1 = arith.constant 0 : i32
    return %c0_i32, %c0_i32_0 : i32, i32
  }
  func.func @transform_7(%arg0: i32) -> (i32, i32) {
    %c0_i32 = arith.constant 0 : i32
    %c0_i32_0 = arith.constant 0 : i32
    %c0_i32_1 = arith.constant 0 : i32
    return %c0_i32, %c0_i32_0 : i32, i32
  }
  func.func @transform_8(%arg0: i32) -> (i32, i32) {
    %c0_i32 = arith.constant 0 : i32
    %c0_i32_0 = arith.constant 0 : i32
    %c0_i32_1 = arith.constant 0 : i32
    return %c0_i32, %c0_i32_0 : i32, i32
  }
  func.func @transform_9(%arg0: i32) -> (i32, i32) {
    %c0_i32 = arith.constant 0 : i32
    %c0_i32_0 = arith.constant 0 : i32
    %c0_i32_1 = arith.constant 0 : i32
    return %c0_i32, %c0_i32_0 : i32, i32
  }
  func.func @transform_10(%arg0: i32) -> (i32, i32) {
    %c0_i32 = arith.constant 0 : i32
    %c0_i32_0 = arith.constant 0 : i32
    %c0_i32_1 = arith.constant 0 : i32
    return %c0_i32, %c0_i32_0 : i32, i32
  }
  func.func @transform_11(%arg0: i32) -> (i32, i32) {
    %c0_i32 = arith.constant 0 : i32
    %c0_i32_0 = arith.constant 0 : i32
    %c0_i32_1 = arith.constant 0 : i32
    return %c0_i32, %c0_i32_0 : i32, i32
  }
  func.func @transform_12(%arg0: i32) -> (i32, i32) {
    %c0_i32 = arith.constant 0 : i32
    %c0_i32_0 = arith.constant 0 : i32
    return %arg0, %c0_i32 : i32, i32
  }
}

</mosaic_0001>

<llo_original>
// kernel: tpu_custom_call.1
$region0: #{tpu_custom_call.1}
  #allocation0 [shape = 'u32[]', space=smem, size = 0x4, offset = 0x4, fixed_abs, tag = 'smem constant byte address 0x4 - core index']
  #allocation1 [shape = 'u32[144,128]{1,0:T(1,128)}', space=vmem, size = 0x12000, scoped, tag = 'internal scratch']
  %s0 = inlined_call_operand.hbm [shape: f32[8,128], index: 0, kind: input, shape index: {}]
  %s1 = inlined_call_operand.hbm [shape: f32[8,128], index: 1, kind: input, shape index: {}]
  %s2 = inlined_call_operand.hbm [shape: f32[8,128], index: 2, kind: input, shape index: {}]
  %s3 = inlined_call_operand.vmem [shape: f32[8,128], index: 3, kind: input, shape index: {}]
  %s4 = inlined_call_operand.hbm [shape: f32[128,128], index: 4, kind: input, shape index: {}]
  %s5 = inlined_call_operand.vmem [shape: f32[1,128], index: 5, kind: input, shape index: {}]
  %s6 = inlined_call_operand.hbm [shape: f32[128,128], index: 6, kind: input, shape index: {}]
  %s7 = inlined_call_operand.vmem [shape: f32[1,128], index: 7, kind: input, shape index: {}]
  %s8 = inlined_call_operand.hbm [shape: f32[128,128], index: 8, kind: input, shape index: {}]
  %s9 = inlined_call_operand.vmem [shape: f32[1,128], index: 9, kind: input, shape index: {}]
  %s10 = inlined_call_operand.hbm [shape: f32[128,128], index: 10, kind: input, shape index: {}]
  %s11 = inlined_call_operand.vmem [shape: f32[1,128], index: 11, kind: input, shape index: {}]
  %s12 = inlined_call_operand.hbm [shape: f32[8,128], index: 12, kind: output, shape index: {}]
  %s13 = sld [smem:[#allocation0]]
  $region86: #{tpu_custom_call.1} parent=0
    _
  %s15 = ssub.s32 1, %s13
  %s16 = scalar_select 0, %s15, %s13
  $region1: #{tpu_custom_call.1} parent=0
    #allocation2 [shape = 'u8[4096]{0}', space=vmem, size = 0x1000, scoped, tag = 'input window, operand 0, single buffered']
    #allocation3 [shape = 's32[1]{0}', space=sflag, size = 0x4, scoped, tag = 'scoped memory for tpu_custom_call.1']
    #allocation4 [shape = 's32[1]{0}', space=sflag, size = 0x4, scoped, tag = 'scoped memory for tpu_custom_call.1']
    #allocation5 [shape = 'u8[4096]{0}', space=vmem, size = 0x1000, scoped, tag = 'input window, operand 1, single buffered']
    #allocation6 [shape = 's32[1]{0}', space=sflag, size = 0x4, scoped, tag = 'scoped memory for tpu_custom_call.1']
    #allocation7 [shape = 'u8[4096]{0}', space=vmem, size = 0x1000, scoped, tag = 'input window, operand 2, single buffered']
    #allocation8 [shape = 'u8[65536]{0}', space=vmem, size = 0x10000, scoped, tag = 'input window, operand 4, single buffered']
    #allocation9 [shape = 's32[1]{0}', space=sflag, size = 0x4, scoped, tag = 'scoped memory for tpu_custom_call.1']
    #allocation10 [shape = 'u8[65536]{0}', space=vmem, size = 0x10000, scoped, tag = 'input window, operand 6, single buffered']
    #allocation11 [shape = 'u8[65536]{0}', space=vmem, size = 0x10000, scoped, tag = 'input window, operand 8, single buffered']
    #allocation12 [shape = 's32[1]{0}', space=sflag, size = 0x4, scoped, tag = 'scoped memory for tpu_custom_call.1']
    #allocation13 [shape = 'u8[65536]{0}', space=vmem, size = 0x10000, scoped, tag = 'input window, operand 10, single buffered']
    #allocation14 [shape = 'u8[4096]{0}', space=vmem, size = 0x1000, scoped, tag = 'output window, operand 0, single buffered']
    %17 = vsyncpa [#allocation3], 0
    %18 = vsyncpa [#allocation6], 0
    %19 = vsyncpa [#allocation9], 0
    %20 = vsyncpa [#allocation12], 0
    %21 = vsyncpa [#allocation4], 0
    // Predicated region
    $region2: #{tpu_custom_call.1} parent=1 // pred_check
      _
    $region3: #{tpu_custom_call.1} parent=1 // pred_check_branch
      %23 = sbr.rel (0) target = $region5
    $region4: #{tpu_custom_call.1} parent=1 // pred_region
      %s25 = ssub.s32 128, 128
      %26 = vsyncadd [#allocation3], %s25
      %s28 = sshll.u32 [#allocation2], 4
      %s29 = int_to_ptr.vmem [resolvable:$true] %s28
      %31 = dma.hbm_to_vmem [thread:$0]  %s0, 128, %s29, [#allocation3]
    $region5: #{tpu_custom_call.1} parent=1 // pred_fallthru
      _
    // Predicated region
    $region6: #{tpu_custom_call.1} parent=1 // pred_check
      _
    $region7: #{tpu_custom_call.1} parent=1 // pred_check_branch
      %33 = sbr.rel (0) target = $region9
    $region8: #{tpu_custom_call.1} parent=1 // pred_region
      %s35 = ssub.s32 128, 128
      %36 = vsyncadd [#allocation6], %s35
      %s38 = sshll.u32 [#allocation5], 4
      %s39 = int_to_ptr.vmem [resolvable:$true] %s38
      %41 = dma.hbm_to_vmem [thread:$0]  %s1, 128, %s39, [#allocation6]
    $region9: #{tpu_custom_call.1} parent=1 // pred_fallthru
      _
    // Predicated region
    $region10: #{tpu_custom_call.1} parent=1 // pred_check
      _
    $region11: #{tpu_custom_call.1} parent=1 // pred_check_branch
      %43 = sbr.rel (0) target = $region13
    $region12: #{tpu_custom_call.1} parent=1 // pred_region
      %s45 = ssub.s32 128, 128
      %46 = vsyncadd [#allocation6], %s45
      %s48 = sshll.u32 [#allocation7], 4
      %s49 = int_to_ptr.vmem [resolvable:$true] %s48
      %51 = dma.hbm_to_vmem [thread:$0]  %s2, 128, %s49, [#allocation6]
    $region13: #{tpu_custom_call.1} parent=1 // pred_fallthru
      _
    // Predicated region
    $region14: #{tpu_custom_call.1} parent=1 // pred_check
      _
    $region15: #{tpu_custom_call.1} parent=1 // pred_check_branch
      %53 = sbr.rel (0) target = $region17
    $region16: #{tpu_custom_call.1} parent=1 // pred_region
      _
    $region17: #{tpu_custom_call.1} parent=1 // pred_fallthru
      _
    // Predicated region
    $region18: #{tpu_custom_call.1} parent=1 // pred_check
      _
    $region19: #{tpu_custom_call.1} parent=1 // pred_check_branch
      %55 = sbr.rel (0) target = $region21
    $region20: #{tpu_custom_call.1} parent=1 // pred_region
      %s57 = ssub.s32 2048, 2048
      %58 = vsyncadd [#allocation9], %s57
      %s59 = sshll.u32 [#allocation8], 4
      %s60 = int_to_ptr.vmem [resolvable:$true] %s59
      %65 = dma.hbm_to_vmem [thread:$0]  %s4, 2048, %s60, [#allocation9], 128, 128, 8
    $region21: #{tpu_custom_call.1} parent=1 // pred_fallthru
      _
    // Predicated region
    $region22: #{tpu_custom_call.1} parent=1 // pred_check
      _
    $region23: #{tpu_custom_call.1} parent=1 // pred_check_branch
      %67 = sbr.rel (0) target = $region25
    $region24: #{tpu_custom_call.1} parent=1 // pred_region
      _
    $region25: #{tpu_custom_call.1} parent=1 // pred_fallthru
      _
    // Predicated region
    $region26: #{tpu_custom_call.1} parent=1 // pred_check
      _
    $region27: #{tpu_custom_call.1} parent=1 // pred_check_branch
      %69 = sbr.rel (0) target = $region29
    $region28: #{tpu_custom_call.1} parent=1 // pred_region
      %s71 = ssub.s32 2048, 2048
      %72 = vsyncadd [#allocation9], %s71
      %s73 = sshll.u32 [#allocation10], 4
      %s74 = int_to_ptr.vmem [resolvable:$true] %s73
      %79 = dma.hbm_to_vmem [thread:$0]  %s6, 2048, %s74, [#allocation9], 128, 128, 8
    $region29: #{tpu_custom_call.1} parent=1 // pred_fallthru
      _
    // Predicated region
    $region30: #{tpu_custom_call.1} parent=1 // pred_check
      _
    $region31: #{tpu_custom_call.1} parent=1 // pred_check_branch
      %81 = sbr.rel (0) target = $region33
    $region32: #{tpu_custom_call.1} parent=1 // pred_region
      _
    $region33: #{tpu_custom_call.1} parent=1 // pred_fallthru
      _
    // Predicated region
    $region34: #{tpu_custom_call.1} parent=1 // pred_check
      _
    $region35: #{tpu_custom_call.1} parent=1 // pred_check_branch
      %83 = sbr.rel (0) target = $region37
    $region36: #{tpu_custom_call.1} parent=1 // pred_region
      %s85 = ssub.s32 2048, 2048
      %86 = vsyncadd [#allocation12], %s85
      %s87 = sshll.u32 [#allocation11], 4
      %s88 = int_to_ptr.vmem [resolvable:$true] %s87
      %93 = dma.hbm_to_vmem [thread:$0]  %s8, 2048, %s88, [#allocation12], 128, 128, 8
    $region37: #{tpu_custom_call.1} parent=1 // pred_fallthru
      _
    // Predicated region
    $region38: #{tpu_custom_call.1} parent=1 // pred_check
      _
    $region39: #{tpu_custom_call.1} parent=1 // pred_check_branch
      %95 = sbr.rel (0) target = $region41
    $region40: #{tpu_custom_call.1} parent=1 // pred_region
      _
    $region41: #{tpu_custom_call.1} parent=1 // pred_fallthru
      _
    // Predicated region
    $region42: #{tpu_custom_call.1} parent=1 // pred_check
      _
    $region43: #{tpu_custom_call.1} parent=1 // pred_check_branch
      %97 = sbr.rel (0) target = $region45
    $region44: #{tpu_custom_call.1} parent=1 // pred_region
      %s99 = ssub.s32 2048, 2048
      %100 = vsyncadd [#allocation12], %s99
      %s101 = sshll.u32 [#allocation13], 4
      %s102 = int_to_ptr.vmem [resolvable:$true] %s101
      %107 = dma.hbm_to_vmem [thread:$0]  %s10, 2048, %s102, [#allocation12], 128, 128, 8
    $region45: #{tpu_custom_call.1} parent=1 // pred_fallthru
      _
    // Predicated region
    $region46: #{tpu_custom_call.1} parent=1 // pred_check
      _
    $region47: #{tpu_custom_call.1} parent=1 // pred_check_branch
      %109 = sbr.rel (0) target = $region49
    $region48: #{tpu_custom_call.1} parent=1 // pred_region
      _
    $region49: #{tpu_custom_call.1} parent=1 // pred_fallthru
      _
    // Predicated region
    $region50: #{tpu_custom_call.1} parent=1 // pred_check
      _
    $region51: #{tpu_custom_call.1} parent=1 // pred_check_branch
      %111 = sbr.rel (0) target = $region53
    $region52: #{tpu_custom_call.1} parent=1 // pred_region
      %112 = dma.done [#allocation3], 128
    $region53: #{tpu_custom_call.1} parent=1 // pred_fallthru
      _
    // Predicated region
    $region54: #{tpu_custom_call.1} parent=1 // pred_check
      _
    $region55: #{tpu_custom_call.1} parent=1 // pred_check_branch
      %114 = sbr.rel (0) target = $region57
    $region56: #{tpu_custom_call.1} parent=1 // pred_region
      %115 = dma.done [#allocation6], 128
    $region57: #{tpu_custom_call.1} parent=1 // pred_fallthru
      _
    // Predicated region
    $region58: #{tpu_custom_call.1} parent=1 // pred_check
      _
    $region59: #{tpu_custom_call.1} parent=1 // pred_check_branch
      %117 = sbr.rel (0) target = $region61
    $region60: #{tpu_custom_call.1} parent=1 // pred_region
      %118 = dma.done [#allocation6], 128
    $region61: #{tpu_custom_call.1} parent=1 // pred_fallthru
      _
    // Predicated region
    $region62: #{tpu_custom_call.1} parent=1 // pred_check
      _
    $region63: #{tpu_custom_call.1} parent=1 // pred_check_branch
      %120 = sbr.rel (0) target = $region65
    $region64: #{tpu_custom_call.1} parent=1 // pred_region
      %121 = dma.done [#allocation9], 2048
    $region65: #{tpu_custom_call.1} parent=1 // pred_fallthru
      _
    // Predicated region
    $region66: #{tpu_custom_call.1} parent=1 // pred_check
      _
    $region67: #{tpu_custom_call.1} parent=1 // pred_check_branch
      %123 = sbr.rel (0) target = $region69
    $region68: #{tpu_custom_call.1} parent=1 // pred_region
      %124 = dma.done [#allocation9], 2048
    $region69: #{tpu_custom_call.1} parent=1 // pred_fallthru
      _
    // Predicated region
    $region70: #{tpu_custom_call.1} parent=1 // pred_check
      _
    $region71: #{tpu_custom_call.1} parent=1 // pred_check_branch
      %126 = sbr.rel (0) target = $region73
    $region72: #{tpu_custom_call.1} parent=1 // pred_region
      %127 = dma.done [#allocation12], 2048
    $region73: #{tpu_custom_call.1} parent=1 // pred_fallthru
      _
    // Predicated region
    $region74: #{tpu_custom_call.1} parent=1 // pred_check
      _
    $region75: #{tpu_custom_call.1} parent=1 // pred_check_branch
      %129 = sbr.rel (0) target = $region77
    $region76: #{tpu_custom_call.1} parent=1 // pred_region
      %130 = dma.done [#allocation12], 2048
    $region77: #{tpu_custom_call.1} parent=1 // pred_fallthru
      _
    %v131 = vld [vmem:[#allocation2] sm:$0xff]
    %v132 = vld [vmem:[#allocation5] sm:$0xff]
    %v133 = vmul.f32 %v131, %v132
    %v134 = vld [vmem:[#allocation8] sm:$0xff]
    %v135 = vld [vmem:[#allocation8 + $0x8] sm:$0xff]
    %v136 = vld [vmem:[#allocation8 + $0x10] sm:$0xff]
    %v137 = vld [vmem:[#allocation8 + $0x18] sm:$0xff]
    %v138 = vld [vmem:[#allocation8 + $0x20] sm:$0xff]
    %v139 = vld [vmem:[#allocation8 + $0x28] sm:$0xff]
    %v140 = vld [vmem:[#allocation8 + $0x30] sm:$0xff]
    %v141 = vld [vmem:[#allocation8 + $0x38] sm:$0xff]
    %v142 = vld [vmem:[#allocation8 + $0x40] sm:$0xff]
    %v143 = vld [vmem:[#allocation8 + $0x48] sm:$0xff]
    %v144 = vld [vmem:[#allocation8 + $0x50] sm:$0xff]
    %v145 = vld [vmem:[#allocation8 + $0x58] sm:$0xff]
    %v146 = vld [vmem:[#allocation8 + $0x60] sm:$0xff]
    %v147 = vld [vmem:[#allocation8 + $0x68] sm:$0xff]
    %v148 = vld [vmem:[#allocation8 + $0x70] sm:$0xff]
    %v149 = vld [vmem:[#allocation8 + $0x78] sm:$0xff]
    %v150 = vld [vmem:[%s5] sm:$0x1]
    %v152 = vlaneseq
    %v153 = vshrl.u32 %v152, 7
    %v154 = vsub.s32 0, %v153
    %v155 = vrot.slane %v150, %v154
    %157 = vmatprep.subr.mxu0 0.0
    %158 = vmatpush1.msra.mxu0 %v134
    %159 = vmatprep.subr.mxu0 0.0
    %160 = vmatpush1.msra.mxu0 %v135
    %161 = vmatprep.subr.mxu0 0.0
    %162 = vmatpush1.msra.mxu0 %v136
    %163 = vmatprep.subr.mxu0 0.0
    %164 = vmatpush1.msra.mxu0 %v137
    %165 = vmatprep.subr.mxu0 0.0
    %166 = vmatpush1.msra.mxu0 %v138
    %167 = vmatprep.subr.mxu0 0.0
    %168 = vmatpush1.msra.mxu0 %v139
    %169 = vmatprep.subr.mxu0 0.0
    %170 = vmatpush1.msra.mxu0 %v140
    %171 = vmatprep.subr.mxu0 0.0
    %172 = vmatpush1.msra.mxu0 %v141
    %173 = vmatprep.subr.mxu0 0.0
    %174 = vmatpush1.msra.mxu0 %v142
    %175 = vmatprep.subr.mxu0 0.0
    %176 = vmatpush1.msra.mxu0 %v143
    %177 = vmatprep.subr.mxu0 0.0
    %178 = vmatpush1.msra.mxu0 %v144
    %179 = vmatprep.subr.mxu0 0.0
    %180 = vmatpush1.msra.mxu0 %v145
    %181 = vmatprep.subr.mxu0 0.0
    %182 = vmatpush1.msra.mxu0 %v146
    %183 = vmatprep.subr.mxu0 0.0
    %184 = vmatpush1.msra.mxu0 %v147
    %185 = vmatprep.subr.mxu0 0.0
    %186 = vmatpush1.msra.mxu0 %v148
    %187 = vmatprep.subr.mxu0 0.0
    %188 = vmatpush1.msra.mxu0 %v149
    %189 = vmatprep.subr.mxu0 0.0
    %190 = vmatpush1.msra.mxu0 0.0
    %191 = vmatprep.subr.mxu0 0.0
    %192 = vmatpush1.msra.mxu0 0.0
    %193 = vmatprep.subr.mxu0 0.0
    %194 = vmatpush1.msra.mxu0 0.0
    %195 = vmatprep.subr.mxu0 0.0
    %196 = vmatpush1.msra.mxu0 0.0
    %197 = vmatprep.subr.mxu0 0.0
    %198 = vmatpush1.msra.mxu0 0.0
    %199 = vmatprep.subr.mxu0 0.0
    %200 = vmatpush1.msra.mxu0 0.0
    %201 = vmatprep.subr.mxu0 0.0
    %202 = vmatpush1.msra.mxu0 0.0
    %203 = vmatprep.subr.mxu0 0.0
    %204 = vmatpush1.msra.mxu0 0.0
    %205 = vmatprep.subr.mxu0 0.0
    %206 = vmatpush1.msra.mxu0 0.0
    %207 = vmatprep.subr.mxu0 0.0
    %208 = vmatpush1.msra.mxu0 0.0
    %209 = vmatprep.subr.mxu0 0.0
    %210 = vmatpush1.msra.mxu0 0.0
    %211 = vmatprep.subr.mxu0 0.0
    %212 = vmatpush1.msra.mxu0 0.0
    %213 = vmatprep.subr.mxu0 0.0
    %214 = vmatpush1.msra.mxu0 0.0
    %215 = vmatprep.subr.mxu0 0.0
    %216 = vmatpush1.msra.mxu0 0.0
    %217 = vmatprep.subr.mxu0 0.0
    %218 = vmatpush1.msra.mxu0 0.0
    %219 = vmatprep.subr.mxu0 0.0
    %220 = vmatpush1.msra.mxu0 0.0
    %221 = vmatprep.mubr.f32.mxu0 0.0
    %222 = vmatmul.mubr.f32.gmra.mrb[0].mxu0 %v133
    %v223 = vpop.f32.mrb[0].mxu0
    %v224 = vadd.f32 %v155, %v223
    %v225 = vpop.f32.mrb[0].mxu0
    %226 = vdwg.mxu0
    %v227 = vmax.f32 %v224, 0.0
    %v228 = vld [vmem:[#allocation7] sm:$0xff]
    %v229 = vmul.f32 %v227, %v228
    %v230 = vld [vmem:[#allocation10] sm:$0xff]
    %v231 = vld [vmem:[#allocation10 + $0x8] sm:$0xff]
    %v232 = vld [vmem:[#allocation10 + $0x10] sm:$0xff]
    %v233 = vld [vmem:[#allocation10 + $0x18] sm:$0xff]
    %v234 = vld [vmem:[#allocation10 + $0x20] sm:$0xff]
    %v235 = vld [vmem:[#allocation10 + $0x28] sm:$0xff]
    %v236 = vld [vmem:[#allocation10 + $0x30] sm:$0xff]
    %v237 = vld [vmem:[#allocation10 + $0x38] sm:$0xff]
    %v238 = vld [vmem:[#allocation10 + $0x40] sm:$0xff]
    %v239 = vld [vmem:[#allocation10 + $0x48] sm:$0xff]
    %v240 = vld [vmem:[#allocation10 + $0x50] sm:$0xff]
    %v241 = vld [vmem:[#allocation10 + $0x58] sm:$0xff]
    %v242 = vld [vmem:[#allocation10 + $0x60] sm:$0xff]
    %v243 = vld [vmem:[#allocation10 + $0x68] sm:$0xff]
    %v244 = vld [vmem:[#allocation10 + $0x70] sm:$0xff]
    %v245 = vld [vmem:[#allocation10 + $0x78] sm:$0xff]
    %v246 = vld [vmem:[%s7] sm:$0x1]
    %v248 = vlaneseq
    %v249 = vshrl.u32 %v248, 7
    %v250 = vsub.s32 0, %v249
    %v251 = vrot.slane %v246, %v250
    %253 = vmatprep.subr.mxu0 0.0
    %254 = vmatpush1.msra.mxu0 %v230
    %255 = vmatprep.subr.mxu0 0.0
    %256 = vmatpush1.msra.mxu0 %v231
    %257 = vmatprep.subr.mxu0 0.0
    %258 = vmatpush1.msra.mxu0 %v232
    %259 = vmatprep.subr.mxu0 0.0
    %260 = vmatpush1.msra.mxu0 %v233
    %261 = vmatprep.subr.mxu0 0.0
    %262 = vmatpush1.msra.mxu0 %v234
    %263 = vmatprep.subr.mxu0 0.0
    %264 = vmatpush1.msra.mxu0 %v235
    %265 = vmatprep.subr.mxu0 0.0
    %266 = vmatpush1.msra.mxu0 %v236
    %267 = vmatprep.subr.mxu0 0.0
    %268 = vmatpush1.msra.mxu0 %v237
    %269 = vmatprep.subr.mxu0 0.0
    %270 = vmatpush1.msra.mxu0 %v238
    %271 = vmatprep.subr.mxu0 0.0
    %272 = vmatpush1.msra.mxu0 %v239
    %273 = vmatprep.subr.mxu0 0.0
    %274 = vmatpush1.msra.mxu0 %v240
    %275 = vmatprep.subr.mxu0 0.0
    %276 = vmatpush1.msra.mxu0 %v241
    %277 = vmatprep.subr.mxu0 0.0
    %278 = vmatpush1.msra.mxu0 %v242
    %279 = vmatprep.subr.mxu0 0.0
    %280 = vmatpush1.msra.mxu0 %v243
    %281 = vmatprep.subr.mxu0 0.0
    %282 = vmatpush1.msra.mxu0 %v244
    %283 = vmatprep.subr.mxu0 0.0
    %284 = vmatpush1.msra.mxu0 %v245
    %285 = vmatprep.subr.mxu0 0.0
    %286 = vmatpush1.msra.mxu0 0.0
    %287 = vmatprep.subr.mxu0 0.0
    %288 = vmatpush1.msra.mxu0 0.0
    %289 = vmatprep.subr.mxu0 0.0
    %290 = vmatpush1.msra.mxu0 0.0
    %291 = vmatprep.subr.mxu0 0.0
    %292 = vmatpush1.msra.mxu0 0.0
    %293 = vmatprep.subr.mxu0 0.0
    %294 = vmatpush1.msra.mxu0 0.0
    %295 = vmatprep.subr.mxu0 0.0
    %296 = vmatpush1.msra.mxu0 0.0
    %297 = vmatprep.subr.mxu0 0.0
    %298 = vmatpush1.msra.mxu0 0.0
    %299 = vmatprep.subr.mxu0 0.0
    %300 = vmatpush1.msra.mxu0 0.0
    %301 = vmatprep.subr.mxu0 0.0
    %302 = vmatpush1.msra.mxu0 0.0
    %303 = vmatprep.subr.mxu0 0.0
    %304 = vmatpush1.msra.mxu0 0.0
    %305 = vmatprep.subr.mxu0 0.0
    %306 = vmatpush1.msra.mxu0 0.0
    %307 = vmatprep.subr.mxu0 0.0
    %308 = vmatpush1.msra.mxu0 0.0
    %309 = vmatprep.subr.mxu0 0.0
    %310 = vmatpush1.msra.mxu0 0.0
    %311 = vmatprep.subr.mxu0 0.0
    %312 = vmatpush1.msra.mxu0 0.0
    %313 = vmatprep.subr.mxu0 0.0
    %314 = vmatpush1.msra.mxu0 0.0
    %315 = vmatprep.subr.mxu0 0.0
    %316 = vmatpush1.msra.mxu0 0.0
    %317 = vmatprep.mubr.f32.mxu0 0.0
    %318 = vmatmul.mubr.f32.gmra.mrb[0].mxu0 %v229
    %v319 = vpop.f32.mrb[0].mxu0
    %v320 = vadd.f32 %v251, %v319
    %v321 = vpop.f32.mrb[0].mxu0
    %322 = vdwg.mxu0
    %v323 = vmax.f32 %v320, 0.0
    %v324 = vld [vmem:[%s3] sm:$0xff]
    %v325 = vmul.f32 %v323, %v324
    %v326 = vld [vmem:[#allocation11] sm:$0xff]
    %v327 = vld [vmem:[#allocation11 + $0x8] sm:$0xff]
    %v328 = vld [vmem:[#allocation11 + $0x10] sm:$0xff]
    %v329 = vld [vmem:[#allocation11 + $0x18] sm:$0xff]
    %v330 = vld [vmem:[#allocation11 + $0x20] sm:$0xff]
    %v331 = vld [vmem:[#allocation11 + $0x28] sm:$0xff]
    %v332 = vld [vmem:[#allocation11 + $0x30] sm:$0xff]
    %v333 = vld [vmem:[#allocation11 + $0x38] sm:$0xff]
    %v334 = vld [vmem:[#allocation11 + $0x40] sm:$0xff]
    %v335 = vld [vmem:[#allocation11 + $0x48] sm:$0xff]
    %v336 = vld [vmem:[#allocation11 + $0x50] sm:$0xff]
    %v337 = vld [vmem:[#allocation11 + $0x58] sm:$0xff]
    %v338 = vld [vmem:[#allocation11 + $0x60] sm:$0xff]
    %v339 = vld [vmem:[#allocation11 + $0x68] sm:$0xff]
    %v340 = vld [vmem:[#allocation11 + $0x70] sm:$0xff]
    %v341 = vld [vmem:[#allocation11 + $0x78] sm:$0xff]
    %v342 = vld [vmem:[%s9] sm:$0x1]
    %v344 = vlaneseq
    %v345 = vshrl.u32 %v344, 7
    %v346 = vsub.s32 0, %v345
    %v347 = vrot.slane %v342, %v346
    %349 = vmatprep.subr.mxu0 0.0
    %350 = vmatpush1.msra.mxu0 %v326
    %351 = vmatprep.subr.mxu0 0.0
    %352 = vmatpush1.msra.mxu0 %v327
    %353 = vmatprep.subr.mxu0 0.0
    %354 = vmatpush1.msra.mxu0 %v328
    %355 = vmatprep.subr.mxu0 0.0
    %356 = vmatpush1.msra.mxu0 %v329
    %357 = vmatprep.subr.mxu0 0.0
    %358 = vmatpush1.msra.mxu0 %v330
    %359 = vmatprep.subr.mxu0 0.0
    %360 = vmatpush1.msra.mxu0 %v331
    %361 = vmatprep.subr.mxu0 0.0
    %362 = vmatpush1.msra.mxu0 %v332
    %363 = vmatprep.subr.mxu0 0.0
    %364 = vmatpush1.msra.mxu0 %v333
    %365 = vmatprep.subr.mxu0 0.0
    %366 = vmatpush1.msra.mxu0 %v334
    %367 = vmatprep.subr.mxu0 0.0
    %368 = vmatpush1.msra.mxu0 %v335
    %369 = vmatprep.subr.mxu0 0.0
    %370 = vmatpush1.msra.mxu0 %v336
    %371 = vmatprep.subr.mxu0 0.0
    %372 = vmatpush1.msra.mxu0 %v337
    %373 = vmatprep.subr.mxu0 0.0
    %374 = vmatpush1.msra.mxu0 %v338
    %375 = vmatprep.subr.mxu0 0.0
    %376 = vmatpush1.msra.mxu0 %v339
    %377 = vmatprep.subr.mxu0 0.0
    %378 = vmatpush1.msra.mxu0 %v340
    %379 = vmatprep.subr.mxu0 0.0
    %380 = vmatpush1.msra.mxu0 %v341
    %381 = vmatprep.subr.mxu0 0.0
    %382 = vmatpush1.msra.mxu0 0.0
    %383 = vmatprep.subr.mxu0 0.0
    %384 = vmatpush1.msra.mxu0 0.0
    %385 = vmatprep.subr.mxu0 0.0
    %386 = vmatpush1.msra.mxu0 0.0
    %387 = vmatprep.subr.mxu0 0.0
    %388 = vmatpush1.msra.mxu0 0.0
    %389 = vmatprep.subr.mxu0 0.0
    %390 = vmatpush1.msra.mxu0 0.0
    %391 = vmatprep.subr.mxu0 0.0
    %392 = vmatpush1.msra.mxu0 0.0
    %393 = vmatprep.subr.mxu0 0.0
    %394 = vmatpush1.msra.mxu0 0.0
    %395 = vmatprep.subr.mxu0 0.0
    %396 = vmatpush1.msra.mxu0 0.0
    %397 = vmatprep.subr.mxu0 0.0
    %398 = vmatpush1.msra.mxu0 0.0
    %399 = vmatprep.subr.mxu0 0.0
    %400 = vmatpush1.msra.mxu0 0.0
    %401 = vmatprep.subr.mxu0 0.0
    %402 = vmatpush1.msra.mxu0 0.0
    %403 = vmatprep.subr.mxu0 0.0
    %404 = vmatpush1.msra.mxu0 0.0
    %405 = vmatprep.subr.mxu0 0.0
    %406 = vmatpush1.msra.mxu0 0.0
    %407 = vmatprep.subr.mxu0 0.0
    %408 = vmatpush1.msra.mxu0 0.0
    %409 = vmatprep.subr.mxu0 0.0
    %410 = vmatpush1.msra.mxu0 0.0
    %411 = vmatprep.subr.mxu0 0.0
    %412 = vmatpush1.msra.mxu0 0.0
    %413 = vmatprep.mubr.f32.mxu0 0.0
    %414 = vmatmul.mubr.f32.gmra.mrb[0].mxu0 %v325
    %v415 = vpop.f32.mrb[0].mxu0
    %v416 = vadd.f32 %v347, %v415
    %v417 = vpop.f32.mrb[0].mxu0
    %418 = vdwg.mxu0
    %v419 = vmax.f32 %v416, 0.0
    %v420 = vld [vmem:[#allocation13] sm:$0xff]
    %v421 = vld [vmem:[#allocation13 + $0x8] sm:$0xff]
    %v422 = vld [vmem:[#allocation13 + $0x10] sm:$0xff]
    %v423 = vld [vmem:[#allocation13 + $0x18] sm:$0xff]
    %v424 = vld [vmem:[#allocation13 + $0x20] sm:$0xff]
    %v425 = vld [vmem:[#allocation13 + $0x28] sm:$0xff]
    %v426 = vld [vmem:[#allocation13 + $0x30] sm:$0xff]
    %v427 = vld [vmem:[#allocation13 + $0x38] sm:$0xff]
    %v428 = vld [vmem:[#allocation13 + $0x40] sm:$0xff]
    %v429 = vld [vmem:[#allocation13 + $0x48] sm:$0xff]
    %v430 = vld [vmem:[#allocation13 + $0x50] sm:$0xff]
    %v431 = vld [vmem:[#allocation13 + $0x58] sm:$0xff]
    %v432 = vld [vmem:[#allocation13 + $0x60] sm:$0xff]
    %v433 = vld [vmem:[#allocation13 + $0x68] sm:$0xff]
    %v434 = vld [vmem:[#allocation13 + $0x70] sm:$0xff]
    %v435 = vld [vmem:[#allocation13 + $0x78] sm:$0xff]
    %v436 = vld [vmem:[%s11] sm:$0x1]
    %v438 = vlaneseq
    %v439 = vshrl.u32 %v438, 7
    %v440 = vsub.s32 0, %v439
    %v441 = vrot.slane %v436, %v440
    %443 = vmatprep.subr.mxu0 0.0
    %444 = vmatpush1.msra.mxu0 %v420
    %445 = vmatprep.subr.mxu0 0.0
    %446 = vmatpush1.msra.mxu0 %v421
    %447 = vmatprep.subr.mxu0 0.0
    %448 = vmatpush1.msra.mxu0 %v422
    %449 = vmatprep.subr.mxu0 0.0
    %450 = vmatpush1.msra.mxu0 %v423
    %451 = vmatprep.subr.mxu0 0.0
    %452 = vmatpush1.msra.mxu0 %v424
    %453 = vmatprep.subr.mxu0 0.0
    %454 = vmatpush1.msra.mxu0 %v425
    %455 = vmatprep.subr.mxu0 0.0
    %456 = vmatpush1.msra.mxu0 %v426
    %457 = vmatprep.subr.mxu0 0.0
    %458 = vmatpush1.msra.mxu0 %v427
    %459 = vmatprep.subr.mxu0 0.0
    %460 = vmatpush1.msra.mxu0 %v428
    %461 = vmatprep.subr.mxu0 0.0
    %462 = vmatpush1.msra.mxu0 %v429
    %463 = vmatprep.subr.mxu0 0.0
    %464 = vmatpush1.msra.mxu0 %v430
    %465 = vmatprep.subr.mxu0 0.0
    %466 = vmatpush1.msra.mxu0 %v431
    %467 = vmatprep.subr.mxu0 0.0
    %468 = vmatpush1.msra.mxu0 %v432
    %469 = vmatprep.subr.mxu0 0.0
    %470 = vmatpush1.msra.mxu0 %v433
    %471 = vmatprep.subr.mxu0 0.0
    %472 = vmatpush1.msra.mxu0 %v434
    %473 = vmatprep.subr.mxu0 0.0
    %474 = vmatpush1.msra.mxu0 %v435
    %475 = vmatprep.subr.mxu0 0.0
    %476 = vmatpush1.msra.mxu0 0.0
    %477 = vmatprep.subr.mxu0 0.0
    %478 = vmatpush1.msra.mxu0 0.0
    %479 = vmatprep.subr.mxu0 0.0
    %480 = vmatpush1.msra.mxu0 0.0
    %481 = vmatprep.subr.mxu0 0.0
    %482 = vmatpush1.msra.mxu0 0.0
    %483 = vmatprep.subr.mxu0 0.0
    %484 = vmatpush1.msra.mxu0 0.0
    %485 = vmatprep.subr.mxu0 0.0
    %486 = vmatpush1.msra.mxu0 0.0
    %487 = vmatprep.subr.mxu0 0.0
    %488 = vmatpush1.msra.mxu0 0.0
    %489 = vmatprep.subr.mxu0 0.0
    %490 = vmatpush1.msra.mxu0 0.0
    %491 = vmatprep.subr.mxu0 0.0
    %492 = vmatpush1.msra.mxu0 0.0
    %493 = vmatprep.subr.mxu0 0.0
    %494 = vmatpush1.msra.mxu0 0.0
    %495 = vmatprep.subr.mxu0 0.0
    %496 = vmatpush1.msra.mxu0 0.0
    %497 = vmatprep.subr.mxu0 0.0
    %498 = vmatpush1.msra.mxu0 0.0
    %499 = vmatprep.subr.mxu0 0.0
    %500 = vmatpush1.msra.mxu0 0.0
    %501 = vmatprep.subr.mxu0 0.0
    %502 = vmatpush1.msra.mxu0 0.0
    %503 = vmatprep.subr.mxu0 0.0
    %504 = vmatpush1.msra.mxu0 0.0
    %505 = vmatprep.subr.mxu0 0.0
    %506 = vmatpush1.msra.mxu0 0.0
    %507 = vmatprep.mubr.f32.mxu0 0.0
    %508 = vmatmul.mubr.f32.gmra.mrb[0].mxu0 %v419
    %v509 = vpop.f32.mrb[0].mxu0
    %v510 = vadd.f32 %v441, %v509
    %v511 = vpop.f32.mrb[0].mxu0
    %512 = vdwg.mxu0
    %513 = vst [vmem:[#allocation14] sm:$0xff] %v510
    // Predicated region
    $region78: #{tpu_custom_call.1} parent=1 // pred_check
      _
    $region79: #{tpu_custom_call.1} parent=1 // pred_check_branch
      %515 = sbr.rel (0) target = $region81
    $region80: #{tpu_custom_call.1} parent=1 // pred_region
      %s517 = ssub.s32 128, 128
      %518 = vsyncadd [#allocation4], %s517
      %s520 = sshll.u32 [#allocation14], 4
      %s521 = int_to_ptr.vmem [resolvable:$true] %s520
      %523 = dma.vmem_to_hbm [thread:$0]  %s521, 128, %s12, [#allocation4]
    $region81: #{tpu_custom_call.1} parent=1 // pred_fallthru
      _
    // Predicated region
    $region82: #{tpu_custom_call.1} parent=1 // pred_check
      _
    $region83: #{tpu_custom_call.1} parent=1 // pred_check_branch
      %525 = sbr.rel (0) target = $region85
    $region84: #{tpu_custom_call.1} parent=1 // pred_region
      %526 = dma.done [#allocation4], 128
    $region85: #{tpu_custom_call.1} parent=1 // pred_fallthru
      _
    %527 = vsyncpa [#allocation3], 1
    %528 = vsyncpa [#allocation6], 1
    %529 = vsyncpa [#allocation9], 1
    %530 = vsyncpa [#allocation12], 1
    %531 = vsyncpa [#allocation4], 1

</llo_original>
